<compile_context>
chip_gen: v6e
topology: v6e:2x2x1
jax: 0.10.0
libtpu: 0.0.40
codegen_flags: <defaults>
</compile_context>

<pallas_src>
import jax
import jax.numpy as jnp
from jax.experimental import pallas as pl
from jax.experimental.pallas import tpu as pltpu

# ----------------------- config (synthetic, small) -----------------------
VOCAB_SIZE = 64
HIDDEN = 128                      # lane-aligned (multiple of 128)
POSITION_BUCKET_SIZE = 16
NUM_REL = 2 * POSITION_BUCKET_SIZE - 1   # 31
LN_EPS = 1e-7                     # layer_norm_eps
BATCH = 2
SEQ = 8

TILE_T = 8                        # tokens per grid step (one sublane group);
                                  # raise to 128-256 at real sequence lengths.


# ---------------------------------------------------------------------------
# Fused kernel:
#   - manual double-buffered DMA gather of embedding rows from the
#     HBM-resident table, driven by SMEM (scalar-prefetch) token ids
#   - LayerNorm (no affine) over hidden for the word path
#   - affine LayerNorm of the relative-position table (done once, step 0)
# ---------------------------------------------------------------------------
def _embedding_kernel(ids_ref, table_hbm, rel_ref, gb_ref,
                      word_ref, rel_out_ref, gbuf, sems):
    tile = pl.program_id(0)
    n_tiles = pl.num_programs(0)
    slot = tile & 1

    def start_gather(t, s):
        # Issue TILE_T row DMAs from the HBM table into gather slot `s`.
        @pl.loop(0, TILE_T)
        def _(r):
            row = ids_ref[t * TILE_T + r]
            pltpu.make_async_copy(
                table_hbm.at[pl.ds(row, 1), :],
                gbuf.at[s, pl.ds(r, 1), :],
                sems.at[s, r],
            ).start()

    def wait_gather(s):
        @pl.loop(0, TILE_T)
        def _(r):
            pltpu.make_async_copy(
                table_hbm.at[pl.ds(0, 1), :],
                gbuf.at[s, pl.ds(r, 1), :],
                sems.at[s, r],
            ).wait()

    # Prime the pipeline: first step starts its own gather.
    @pl.when(tile == 0)
    def _():
        start_gather(0, 0)

    # Prefetch the next tile's rows into the other slot; these DMAs overlap
    # with this step's wait + LayerNorm compute + output writeback.
    @pl.when(tile + 1 < n_tiles)
    def _():
        start_gather(tile + 1, 1 - slot)

    # Relative-embedding affine LayerNorm (tiny): done once while the tile-0
    # gather DMAs are in flight.  Its output block index is constant over the
    # grid, so the block stays VMEM-resident and is written back at the end.
    @pl.when(tile == 0)
    def _():
        rel = rel_ref[...].astype(jnp.float32)              # (R_pad, H)
        rmean = jnp.mean(rel, axis=-1, keepdims=True)
        rc = rel - rmean
        rvar = jnp.mean(rc * rc, axis=-1, keepdims=True)
        rel_n = rc * jax.lax.rsqrt(rvar + LN_EPS)
        gamma = gb_ref[0:1, :].astype(jnp.float32)
        beta = gb_ref[1:2, :].astype(jnp.float32)
        rel_out_ref[...] = (rel_n * gamma + beta).astype(rel_out_ref.dtype)

    # Block on this tile's gathered rows, then LayerNorm them.
    wait_gather(slot)

    emb = gbuf[slot].astype(jnp.float32)                    # (TILE_T, H) f32
    mean = jnp.mean(emb, axis=-1, keepdims=True)
    xc = emb - mean
    var = jnp.mean(xc * xc, axis=-1, keepdims=True)         # biased variance
    word = xc * jax.lax.rsqrt(var + LN_EPS)
    # Dropout (inference mode): identity.
    word_ref[...] = word.astype(word_ref.dtype)


# ---------------------------------------------------------------------------
# Module wrapper
# ---------------------------------------------------------------------------
def embedding_forward(input_ids, params):
    """input_ids: (B, S) int32 -> (word (B,S,H) f32, rel (R,H) f32)."""
    B, S = input_ids.shape
    table = params["word_embedding"]        # (V, H), f32 or bf16
    rel = params["relative_embedding"]      # (R, H)
    gamma = params["rel_ln_gamma"]          # (1, H)
    beta = params["rel_ln_beta"]            # (1, H)
    V, H = table.shape
    R = rel.shape[0]
    T = B * S

    # Token ids -> flat int32 vector (scalar prefetch / SMEM), padded to a
    # whole number of tiles.
    n_tiles = pl.cdiv(T, TILE_T)
    T_pad = n_tiles * TILE_T
    ids_flat = input_ids.reshape(T).astype(jnp.int32)
    if T_pad != T:
        ids_flat = jnp.pad(ids_flat, (0, T_pad - T))

    # Pad the relative table to full sublane groups -> dense (unmasked) stores.
    R_pad = ((R + 7) // 8) * 8
    rel_padded = rel if R_pad == R else jnp.pad(rel, ((0, R_pad - R), (0, 0)))

    # Pack gamma/beta into one (2, H) operand (one DMA / double-buffer pair).
    gb = jnp.concatenate([gamma.reshape(1, H), beta.reshape(1, H)], axis=0)

    # Memory-bound op: advertise only the real LN work + bytes moved.
    elem = jnp.dtype(table.dtype).itemsize
    cost = pl.CostEstimate(
        flops=8 * T_pad * H + 10 * R_pad * H,
        transcendentals=T_pad + R_pad,                 # one rsqrt per row
        bytes_accessed=(4 * T_pad                      # ids
                        + elem * T_pad * H             # gathered rows (HBM read)
                        + 4 * T_pad * H                # word output
                        + 2 * 4 * R_pad * H            # rel in/out
                        + 4 * 2 * H),                  # gamma/beta
    )

    grid_spec = pltpu.PrefetchScalarGridSpec(
        num_scalar_prefetch=1,                         # ids -> SMEM
        grid=(n_tiles,),
        in_specs=[
            pl.BlockSpec(memory_space=pl.ANY),                   # table in HBM
            pl.BlockSpec((R_pad, H), lambda i, ids: (0, 0)),     # grid-resident
            pl.BlockSpec((2, H), lambda i, ids: (0, 0)),         # gamma/beta
        ],
        out_specs=[
            pl.BlockSpec((TILE_T, H), lambda i, ids: (i, 0)),    # word tiles
            pl.BlockSpec((R_pad, H), lambda i, ids: (0, 0)),     # rel (resident)
        ],
        scratch_shapes=[
            pltpu.VMEM((2, TILE_T, H), table.dtype),             # gather dbl-buf
            pltpu.SemaphoreType.DMA((2, TILE_T)),                # per-row sems
        ],
    )

    word_flat, rel_out = pl.pallas_call(
        _embedding_kernel,
        grid_spec=grid_spec,
        out_shape=(jax.ShapeDtypeStruct((T_pad, H), jnp.float32),
                   jax.ShapeDtypeStruct((R_pad, H), jnp.float32)),
        compiler_params=pltpu.CompilerParams(
            # Token axis is sequential (manual double-buffer carries state and
            # the rel output is written once on step 0).
            dimension_semantics=("arbitrary",),
            # Explicit scoped-VMEM budget; footprint here is tiny, tune per
            # generation (v5e 16 MiB / v6e 32 MiB / v7x 32 MiB defaults).
            vmem_limit_bytes=32 * 1024 * 1024,
        ),
        cost_estimate=cost,
    )(ids_flat, table, rel_padded, gb)

    return word_flat[:T].reshape(B, S, H), rel_out[:R]


# ----------------------------- reference (pure JAX) ------------------------
def _ref_forward(input_ids, params):
    emb = jnp.take(params["word_embedding"], input_ids, axis=0)
    mean = jnp.mean(emb, -1, keepdims=True)
    var = jnp.mean((emb - mean) ** 2, -1, keepdims=True)
    word = (emb - mean) * jax.lax.rsqrt(var + LN_EPS)

    rel = params["relative_embedding"]
    rmean = jnp.mean(rel, -1, keepdims=True)
    rvar = jnp.mean((rel - rmean) ** 2, -1, keepdims=True)
    rel_n = (rel - rmean) * jax.lax.rsqrt(rvar + LN_EPS)
    rel_out = rel_n * params["rel_ln_gamma"] + params["rel_ln_beta"]
    return word, rel_out


if __name__ == "__main__":
    key = jax.random.PRNGKey(0)
    k_word, k_rel, k_g, k_b, k_ids = jax.random.split(key, 5)

    params = {
        "word_embedding": jax.random.normal(
            k_word, (VOCAB_SIZE, HIDDEN), jnp.float32) * 0.02,
        "relative_embedding": jax.random.normal(
            k_rel, (NUM_REL, HIDDEN), jnp.float32) * 0.02,
        # LayerNorm affine params (perturbed so the affine path is exercised)
        "rel_ln_gamma": 1.0 + 0.1 * jax.random.normal(k_g, (1, HIDDEN), jnp.float32),
        "rel_ln_beta": 0.1 * jax.random.normal(k_b, (1, HIDDEN), jnp.float32),
    }

    input_ids = jax.random.randint(k_ids, (BATCH, SEQ), 0, VOCAB_SIZE, jnp.int32)

    word_out, rel_out = embedding_forward(input_ids, params)
    word_out = jax.block_until_ready(word_out)
    rel_out = jax.block_until_ready(rel_out)

    word_ref, rel_ref = _ref_forward(input_ids, params)
    assert word_out.shape == (BATCH, SEQ, HIDDEN)
    assert rel_out.shape == (NUM_REL, HIDDEN)
    assert jnp.allclose(word_out, word_ref, atol=1e-5, rtol=1e-5)
    assert jnp.allclose(rel_out, rel_ref, atol=1e-5, rtol=1e-5)

    print("KERNEL_OK")
</pallas_src>

<mosaic_0001>
module attributes {stable_mosaic.version = 11 : i64} {
  func.func @_embedding_kernel(%arg0: i32, %arg1: memref<16xi32, #tpu.memory_space<smem>>, %arg2: memref<64x128xf32, #tpu.memory_space<any>>, %arg3: memref<32x128xf32, #tpu.memory_space<vmem>>, %arg4: memref<2x128xf32, #tpu.memory_space<vmem>>, %arg5: memref<8x128xf32, #tpu.memory_space<vmem>>, %arg6: memref<32x128xf32, #tpu.memory_space<vmem>>, %arg7: memref<2x8x128xf32, #tpu.memory_space<vmem>>, %arg8: memref<2x8x!tpu.dma_semaphore, #tpu.memory_space<semaphore_mem>>) attributes {dimension_semantics = [#tpu.dimension_semantics<arbitrary>], iteration_bounds = array<i64: 2>, scalar_prefetch = 1 : i64, scratch_operands = 2 : i64, tpu.core_type = #tpu.core_type<tc>, window_params = [{}, {pipeline_mode = #tpu.pipeline_mode<synchronous>, transform_indices = @transform_1, window_bounds = array<i64: 32, 128>}, {pipeline_mode = #tpu.pipeline_mode<synchronous>, transform_indices = @transform_2, window_bounds = array<i64: 2, 128>}, {transform_indices = @transform_3, window_bounds = array<i64: 8, 128>}, {pipeline_mode = #tpu.pipeline_mode<synchronous>, transform_indices = @transform_4, window_bounds = array<i64: 32, 128>}]} {
    %c1_i32 = arith.constant 1 : i32
    %0 = arith.andi %arg0, %c1_i32 : i32
    %c0_i32 = arith.constant 0 : i32
    %1 = arith.cmpi eq, %arg0, %c0_i32 : i32
    %2 = arith.extui %1 : i1 to i32
    %c0_i32_0 = arith.constant 0 : i32
    %3 = arith.cmpi ne, %2, %c0_i32_0 : i32
    scf.if %3 {
      %c0_i32_15 = arith.constant 0 : i32
      %c8_i32_16 = arith.constant 8 : i32
      %32 = arith.addi %c0_i32_15, %c8_i32_16 : i32
      %c1_i32_17 = arith.constant 1 : i32
      scf.for %arg9 = %c0_i32_15 to %32 step %c1_i32_17  : i32 {
        %c1_i32_19 = arith.constant 1 : i32
        %33 = arith.muli %arg9, %c1_i32_19 : i32
        %c0_i32_20 = arith.constant 0 : i32
        %34 = arith.addi %c0_i32_20, %33 : i32
        %c0_i32_21 = arith.constant 0 : i32
        %35 = arith.addi %c0_i32_21, %34 : i32
        %36 = arith.index_cast %35 : i32 to index
        %37 = memref.load %arg1[%36] : memref<16xi32, #tpu.memory_space<smem>>
        %c0_i32_22 = arith.constant 0 : i32
        %c0_i32_23 = arith.constant 0 : i32
        %c0_i32_24 = arith.constant 0 : i32
        %38 = tpu.memref_slice %arg2[%37, %c0_i32_24] : memref<64x128xf32, #tpu.memory_space<any>> -> memref<1x128xf32, #tpu.memory_space<any>>
        %c0_i32_25 = arith.constant 0 : i32
        %39 = tpu.memref_slice %arg7[%c0_i32_22, %34, %c0_i32_25] : memref<2x8x128xf32, #tpu.memory_space<vmem>> -> memref<1x1x128xf32, #tpu.memory_space<vmem>>
        %40 = tpu.memref_squeeze %39 : memref<1x1x128xf32, #tpu.memory_space<vmem>> -> memref<1x128xf32, #tpu.memory_space<vmem>>
        %41 = tpu.memref_slice %arg8[%c0_i32_23, %34] : memref<2x8x!tpu.dma_semaphore, #tpu.memory_space<semaphore_mem>> -> memref<1x1x!tpu.dma_semaphore, #tpu.memory_space<semaphore_mem>>
        %42 = tpu.memref_squeeze %41 : memref<1x1x!tpu.dma_semaphore, #tpu.memory_space<semaphore_mem>> -> memref<!tpu.dma_semaphore, #tpu.memory_space<semaphore_mem>>
        tpu.enqueue_dma source(%38 : memref<1x128xf32, #tpu.memory_space<any>>) target(%40 : memref<1x128xf32, #tpu.memory_space<vmem>>) target_semaphore(%42 : memref<!tpu.dma_semaphore, #tpu.memory_space<semaphore_mem>>)
      }
      %c8_i32_18 = arith.constant 8 : i32
    } else {
    }
    %c1_i32_1 = arith.constant 1 : i32
    %4 = arith.addi %arg0, %c1_i32_1 : i32
    %c2_i32 = arith.constant 2 : i32
    %5 = arith.cmpi slt, %4, %c2_i32 : i32
    %6 = arith.extui %5 : i1 to i32
    %c0_i32_2 = arith.constant 0 : i32
    %7 = arith.cmpi ne, %6, %c0_i32_2 : i32
    scf.if %7 {
      %c1_i32_15 = arith.constant 1 : i32
      %32 = arith.addi %arg0, %c1_i32_15 : i32
      %c1_i32_16 = arith.constant 1 : i32
      %33 = arith.subi %c1_i32_16, %0 : i32
      %c0_i32_17 = arith.constant 0 : i32
      %c8_i32_18 = arith.constant 8 : i32
      %34 = arith.addi %c0_i32_17, %c8_i32_18 : i32
      %c1_i32_19 = arith.constant 1 : i32
      scf.for %arg9 = %c0_i32_17 to %34 step %c1_i32_19  : i32 {
        %c1_i32_21 = arith.constant 1 : i32
        %35 = arith.muli %arg9, %c1_i32_21 : i32
        %c0_i32_22 = arith.constant 0 : i32
        %36 = arith.addi %c0_i32_22, %35 : i32
        %c8_i32_23 = arith.constant 8 : i32
        %37 = arith.muli %32, %c8_i32_23 : i32
        %38 = arith.addi %37, %36 : i32
        %39 = arith.index_cast %38 : i32 to index
        %40 = memref.load %arg1[%39] : memref<16xi32, #tpu.memory_space<smem>>
        %c0_i32_24 = arith.constant 0 : i32
        %41 = tpu.memref_slice %arg2[%40, %c0_i32_24] : memref<64x128xf32, #tpu.memory_space<any>> -> memref<1x128xf32, #tpu.memory_space<any>>
        %c0_i32_25 = arith.constant 0 : i32
        %42 = tpu.memref_slice %arg7[%33, %36, %c0_i32_25] : memref<2x8x128xf32, #tpu.memory_space<vmem>> -> memref<1x1x128xf32, #tpu.memory_space<vmem>>
        %43 = tpu.memref_squeeze %42 : memref<1x1x128xf32, #tpu.memory_space<vmem>> -> memref<1x128xf32, #tpu.memory_space<vmem>>
        %44 = tpu.memref_slice %arg8[%33, %36] : memref<2x8x!tpu.dma_semaphore, #tpu.memory_space<semaphore_mem>> -> memref<1x1x!tpu.dma_semaphore, #tpu.memory_space<semaphore_mem>>
        %45 = tpu.memref_squeeze %44 : memref<1x1x!tpu.dma_semaphore, #tpu.memory_space<semaphore_mem>> -> memref<!tpu.dma_semaphore, #tpu.memory_space<semaphore_mem>>
        tpu.enqueue_dma source(%41 : memref<1x128xf32, #tpu.memory_space<any>>) target(%43 : memref<1x128xf32, #tpu.memory_space<vmem>>) target_semaphore(%45 : memref<!tpu.dma_semaphore, #tpu.memory_space<semaphore_mem>>)
      }
      %c8_i32_20 = arith.constant 8 : i32
    } else {
    }
    %c0_i32_3 = arith.constant 0 : i32
    %8 = arith.cmpi eq, %arg0, %c0_i32_3 : i32
    %9 = arith.extui %8 : i1 to i32
    %c0_i32_4 = arith.constant 0 : i32
    %10 = arith.cmpi ne, %9, %c0_i32_4 : i32
    scf.if %10 {
      %c0_15 = arith.constant 0 : index
      %c0_16 = arith.constant 0 : index
      %32 = vector.load %arg3[%c0_15, %c0_16] : memref<32x128xf32, #tpu.memory_space<vmem>>, vector<32x128xf32>
      %cst_17 = arith.constant dense<0.000000e+00> : vector<32xf32>
      %33 = vector.multi_reduction <add>, %32, %cst_17 [1] : vector<32x128xf32> to vector<32xf32>
      %34 = vector.shape_cast %33 : vector<32xf32> to vector<32x1xf32>
      %cst_18 = arith.constant 1.280000e+02 : f32
      %35 = vector.broadcast %cst_18 : f32 to vector<32x1xf32>
      %36 = arith.divf %34, %35 : vector<32x1xf32>
      %37 = vector.broadcast %36 : vector<32x1xf32> to vector<32x128xf32>
      %38 = arith.subf %32, %37 : vector<32x128xf32>
      %39 = arith.mulf %38, %38 : vector<32x128xf32>
      %cst_19 = arith.constant dense<0.000000e+00> : vector<32xf32>
      %40 = vector.multi_reduction <add>, %39, %cst_19 [1] : vector<32x128xf32> to vector<32xf32>
      %41 = vector.shape_cast %40 : vector<32xf32> to vector<32x1xf32>
      %cst_20 = arith.constant 1.280000e+02 : f32
      %42 = vector.broadcast %cst_20 : f32 to vector<32x1xf32>
      %43 = arith.divf %41, %42 : vector<32x1xf32>
      %cst_21 = arith.constant 1.000000e-07 : f32
      %44 = vector.broadcast %cst_21 : f32 to vector<32x1xf32>
      %45 = arith.addf %43, %44 : vector<32x1xf32>
      %46 = math.rsqrt %45 : vector<32x1xf32>
      %47 = vector.broadcast %46 : vector<32x1xf32> to vector<32x128xf32>
      %48 = arith.mulf %38, %47 : vector<32x128xf32>
      %c0_22 = arith.constant 0 : index
      %c0_23 = arith.constant 0 : index
      %49 = vector.load %arg4[%c0_22, %c0_23] : memref<2x128xf32, #tpu.memory_space<vmem>>, vector<1x128xf32>
      %c1 = arith.constant 1 : index
      %c0_24 = arith.constant 0 : index
      %50 = vector.load %arg4[%c1, %c0_24] : memref<2x128xf32, #tpu.memory_space<vmem>>, vector<1x128xf32>
      %51 = vector.broadcast %49 : vector<1x128xf32> to vector<32x128xf32>
      %52 = arith.mulf %48, %51 : vector<32x128xf32>
      %53 = vector.broadcast %50 : vector<1x128xf32> to vector<32x128xf32>
      %54 = arith.addf %52, %53 : vector<32x128xf32>
      %c0_25 = arith.constant 0 : index
      %c0_26 = arith.constant 0 : index
      %55 = vector.load %arg6[%c0_25, %c0_26] : memref<32x128xf32, #tpu.memory_space<vmem>>, vector<32x128xf32>
      tpu.vector_store %arg6[%c0_25, %c0_26], %54 {strides = array<i32>} : memref<32x128xf32, #tpu.memory_space<vmem>>, vector<32x128xf32>,
    } else {
    }
    %c0_i32_5 = arith.constant 0 : i32
    %c8_i32 = arith.constant 8 : i32
    %11 = arith.addi %c0_i32_5, %c8_i32 : i32
    %c1_i32_6 = arith.constant 1 : i32
    scf.for %arg9 = %c0_i32_5 to %11 step %c1_i32_6  : i32 {
      %c1_i32_15 = arith.constant 1 : i32
      %32 = arith.muli %arg9, %c1_i32_15 : i32
      %c0_i32_16 = arith.constant 0 : i32
      %33 = arith.addi %c0_i32_16, %32 : i32
      %c0_i32_17 = arith.constant 0 : i32
      %c0_i32_18 = arith.constant 0 : i32
      %34 = tpu.memref_slice %arg2[%c0_i32_17, %c0_i32_18] : memref<64x128xf32, #tpu.memory_space<any>> -> memref<1x128xf32, #tpu.memory_space<any>>
      %c0_i32_19 = arith.constant 0 : i32
      %35 = tpu.memref_slice %arg7[%0, %33, %c0_i32_19] : memref<2x8x128xf32, #tpu.memory_space<vmem>> -> memref<1x1x128xf32, #tpu.memory_space<vmem>>
      %36 = tpu.memref_squeeze %35 : memref<1x1x128xf32, #tpu.memory_space<vmem>> -> memref<1x128xf32, #tpu.memory_space<vmem>>
      %37 = tpu.memref_slice %arg8[%0, %33] : memref<2x8x!tpu.dma_semaphore, #tpu.memory_space<semaphore_mem>> -> memref<1x1x!tpu.dma_semaphore, #tpu.memory_space<semaphore_mem>>
      %38 = tpu.memref_squeeze %37 : memref<1x1x!tpu.dma_semaphore, #tpu.memory_space<semaphore_mem>> -> memref<!tpu.dma_semaphore, #tpu.memory_space<semaphore_mem>>
      tpu.wait_dma2 semaphore(%38 : memref<!tpu.dma_semaphore, #tpu.memory_space<semaphore_mem>>) src(%34 : memref<1x128xf32, #tpu.memory_space<any>>) dst(%36 : memref<1x128xf32, #tpu.memory_space<vmem>>)
    }
    %c8_i32_7 = arith.constant 8 : i32
    %12 = arith.index_cast %0 : i32 to index
    %c0 = arith.constant 0 : index
    %c0_8 = arith.constant 0 : index
    %13 = vector.load %arg7[%12, %c0, %c0_8] : memref<2x8x128xf32, #tpu.memory_space<vmem>>, vector<1x8x128xf32>
    %14 = vector.shape_cast %13 : vector<1x8x128xf32> to vector<8x128xf32>
    %cst = arith.constant dense<0.000000e+00> : vector<8xf32>
    %15 = vector.multi_reduction <add>, %14, %cst [1] : vector<8x128xf32> to vector<8xf32>
    %16 = vector.shape_cast %15 : vector<8xf32> to vector<8x1xf32>
    %cst_9 = arith.constant 1.280000e+02 : f32
    %17 = vector.broadcast %cst_9 : f32 to vector<8x1xf32>
    %18 = arith.divf %16, %17 : vector<8x1xf32>
    %19 = vector.broadcast %18 : vector<8x1xf32> to vector<8x128xf32>
    %20 = arith.subf %14, %19 : vector<8x128xf32>
    %21 = arith.mulf %20, %20 : vector<8x128xf32>
    %cst_10 = arith.constant dense<0.000000e+00> : vector<8xf32>
    %22 = vector.multi_reduction <add>, %21, %cst_10 [1] : vector<8x128xf32> to vector<8xf32>
    %23 = vector.shape_cast %22 : vector<8xf32> to vector<8x1xf32>
    %cst_11 = arith.constant 1.280000e+02 : f32
    %24 = vector.broadcast %cst_11 : f32 to vector<8x1xf32>
    %25 = arith.divf %23, %24 : vector<8x1xf32>
    %cst_12 = arith.constant 1.000000e-07 : f32
    %26 = vector.broadcast %cst_12 : f32 to vector<8x1xf32>
    %27 = arith.addf %25, %26 : vector<8x1xf32>
    %28 = math.rsqrt %27 : vector<8x1xf32>
    %29 = vector.broadcast %28 : vector<8x1xf32> to vector<8x128xf32>
    %30 = arith.mulf %20, %29 : vector<8x128xf32>
    %c0_13 = arith.constant 0 : index
    %c0_14 = arith.constant 0 : index
    %31 = vector.load %arg5[%c0_13, %c0_14] : memref<8x128xf32, #tpu.memory_space<vmem>>, vector<8x128xf32>
    tpu.vector_store %arg5[%c0_13, %c0_14], %30 {strides = array<i32>} : memref<8x128xf32, #tpu.memory_space<vmem>>, vector<8x128xf32>,
    return
  }
  func.func @transform_1(%arg0: i32, %arg1: memref<16xi32, #tpu.memory_space<smem>>) -> (i32, i32) {
    %c0_i32 = arith.constant 0 : i32
    %c0_i32_0 = arith.constant 0 : i32
    %c0_i32_1 = arith.constant 0 : i32
    return %c0_i32, %c0_i32_0 : i32, i32
  }
  func.func @transform_2(%arg0: i32, %arg1: memref<16xi32, #tpu.memory_space<smem>>) -> (i32, i32) {
    %c0_i32 = arith.constant 0 : i32
    %c0_i32_0 = arith.constant 0 : i32
    %c0_i32_1 = arith.constant 0 : i32
    return %c0_i32, %c0_i32_0 : i32, i32
  }
  func.func @transform_3(%arg0: i32, %arg1: memref<16xi32, #tpu.memory_space<smem>>) -> (i32, i32) {
    %c0_i32 = arith.constant 0 : i32
    %c0_i32_0 = arith.constant 0 : i32
    return %arg0, %c0_i32 : i32, i32
  }
  func.func @transform_4(%arg0: i32, %arg1: memref<16xi32, #tpu.memory_space<smem>>) -> (i32, i32) {
    %c0_i32 = arith.constant 0 : i32
    %c0_i32_0 = arith.constant 0 : i32
    %c0_i32_1 = arith.constant 0 : i32
    return %c0_i32, %c0_i32_0 : i32, i32
  }
}

</mosaic_0001>

<llo_original>
// kernel: tpu_custom_call.1
$region0: #{tpu_custom_call.1}
  #allocation0 [shape = 'u32[]', space=smem, size = 0x4, offset = 0x4, fixed_abs, tag = 'smem constant byte address 0x4 - core index']
  #allocation1 [shape = 'u32[144,128]{1,0:T(1,128)}', space=vmem, size = 0x12000, scoped, tag = 'internal scratch']
  #allocation2 [shape = 'f32[2,8,128]{2,1,0:T(8,128)}', space=vmem, size = 0x2000, scoped, tag = 'scratch operand']
  #allocation3 [shape = 's32[16]{0}', space=sflag, size = 0x40, scoped, tag = 'scratch operand']
  #allocation4 [shape = 's32[1]{0}', space=sflag, size = 0x4, scoped, tag = 'scoped memory for tpu_custom_call.1']
  #allocation5 [shape = 'u8[512]{0}', space=smem, size = 0x200, scoped, tag = 'prefetched SMEM operand 0']
  #allocation12 [shape = 's32[]', space=sflag, size = 0x4, offset = 0, fixed_abs, tag = 'sflag constant byte address 0x0 - dummy sync flag']
  #allocation13 [shape = 's32[]', space=sflag, size = 0x4, offset = 0, fixed_abs, tag = 'sflag constant byte address 0x0 - dummy sync flag']
  #allocation14 [shape = 'u32[]', space=smem, size = 0x4, offset = 0x44, fixed_abs, tag = 'smem constant byte address 0x44 - assertion arg 0']
  #allocation15 [shape = 'u32[]', space=smem, size = 0x4, offset = 0x48, fixed_abs, tag = 'smem constant byte address 0x48 - assertion arg 1']
  #allocation16 [shape = 's32[]', space=sflag, size = 0x4, offset = 0, fixed_abs, tag = 'sflag constant byte address 0x0 - dummy sync flag']
  #allocation17 [shape = 's32[]', space=sflag, size = 0x4, offset = 0, fixed_abs, tag = 'sflag constant byte address 0x0 - dummy sync flag']
  %s0 = inlined_call_operand.hbm [shape: s32[16], index: 0, kind: input, shape index: {}]
  %s1 = inlined_call_operand.hbm [shape: f32[64,128], index: 1, kind: input, shape index: {}]
  %s2 = inlined_call_operand.hbm [shape: f32[32,128], index: 2, kind: input, shape index: {}]
  %s3 = inlined_call_operand.vmem [shape: f32[2,128], index: 3, kind: input, shape index: {}]
  %s4 = inlined_call_operand.hbm [shape: f32[16,128], index: 4, kind: output, shape index: {0}]
  %s5 = inlined_call_operand.hbm [shape: f32[32,128], index: 5, kind: output, shape index: {1}]
  %6 = xla_tuple %s4, %s5
  %s7 = sld [smem:[#allocation0]]
  $region94: #{tpu_custom_call.1} parent=0
    _
  %s9 = ssub.s32 1, %s7
  %s10 = scalar_select 0, %s9, %s7
  %12 = dma.hbm_to_smem %s0, 16, [#allocation5], [#allocation4]
  %13 = dma.done [#allocation4], 16
  %14 = sfence
  $region1: #{tpu_custom_call.1} parent=0
    #allocation6 [shape = 'u8[16384]{0}', space=vmem, size = 0x4000, scoped, tag = 'input window, operand 2, single buffered']
    #allocation7 [shape = 's32[2]{0}', space=sflag, size = 0x8, scoped, tag = 'scoped memory for tpu_custom_call.1']
    #allocation8 [shape = 's32[2]{0}', space=sflag, size = 0x8, scoped, tag = 'scoped memory for tpu_custom_call.1']
    #allocation9 [shape = 'u8[8192]{0}', space=vmem, size = 0x2000, scoped, tag = 'output window, operand 0']
    #allocation10 [shape = 'u8[16384]{0}', space=vmem, size = 0x4000, scoped, tag = 'output window, operand 1, single buffered']
    #allocation11 [shape = 's32[1]{0}', space=sflag, size = 0x4, scoped, tag = 'scoped memory for tpu_custom_call.1']
    %15 = vsyncpa [#allocation7], 0
    %16 = vsyncpa [#allocation8], 0
    %s17 = scalar_lea.sflag [#allocation8], 1
    %18 = vsyncpa %s17, 0
    %19 = vsyncpa [#allocation11], 0
    loop: start=0, step=1, limit=4
    $region2: #{tpu_custom_call.1} parent=1 // loop_pre_header
      _
    $region3: #{tpu_custom_call.1} parent=1 // loop_header
      %s21 = sphi 0, %s25
      %p22 = scmp.ge.s32.totalorder %s21, 4
      %s29 = sphi 0, %s29
      %s31 = sphi 0, %s29
      %s32 = sphi 0, %s31
      %s46 = sphi 0, %s32
      %s50 = sphi 0, %s50
      %s52 = sphi 0, %s50
      %s53 = sphi 0, %s52
      %s67 = sphi 0, %s53
      %s73 = sphi 0, %s75
      %s76 = sphi 0, %s73
      %s77 = sphi 0, %s76
      %s93 = sphi 0, %s77
      %s97 = sphi 0, %s97
      %s99 = sphi 0, %s97
      %s100 = sphi 0, %s99
      %s114 = sphi 0, %s100
    $region4: #{tpu_custom_call.1} parent=1 // loop_header_branch
      %24 = sbr.rel (%p22) target = $region8
    $region5: #{tpu_custom_call.1} parent=1 // loop_body
      %s26 = ssub.s32 %s21, 1
      %s27 = ssub.s32 %s21, 2
      %s28 = sadd.s32 %s21, 1
      %s30 = sadd.s32 %s29, 1
      %p33 = scmp.eq.s32.totalorder %s21, 1
      %p34 = scmp.ne.s32.totalorder %s29, %s31
      %p35 = scmp.eq.s32.totalorder %s21, 0
      %p36 = por %p34, %p35
      %p37 = scmp.ne.s32.totalorder %s29, %s31
      %p38 = scmp.eq.s32.totalorder %s26, 1
      %p39 = por %p37, %p38
      %p40 = scmp.ne.s32.totalorder %s31, %s32
      %p41 = scmp.eq.s32.totalorder %s26, 0
      %p42 = por %p40, %p41
      %p43 = scmp.ne.s32.totalorder %s31, %s32
      %p44 = scmp.eq.s32.totalorder %s27, 1
      %p45 = por %p43, %p44
      %p47 = scmp.ne.s32.totalorder %s32, %s46
      %p48 = scmp.eq.s32.totalorder %s27, 0
      %p49 = por %p47, %p48
      %s51 = sadd.s32 %s50, 1
      %p54 = scmp.eq.s32.totalorder %s21, 1
      %p55 = scmp.ne.s32.totalorder %s50, %s52
      %p56 = scmp.eq.s32.totalorder %s21, 0
      %p57 = por %p55, %p56
      %p58 = scmp.ne.s32.totalorder %s50, %s52
      %p59 = scmp.eq.s32.totalorder %s26, 1
      %p60 = por %p58, %p59
      %p61 = scmp.ne.s32.totalorder %s52, %s53
      %p62 = scmp.eq.s32.totalorder %s26, 0
      %p63 = por %p61, %p62
      %p64 = scmp.ne.s32.totalorder %s52, %s53
      %p65 = scmp.eq.s32.totalorder %s27, 1
      %p66 = por %p64, %p65
      %p68 = scmp.ne.s32.totalorder %s53, %s67
      %p69 = scmp.eq.s32.totalorder %s27, 0
      %p70 = por %p68, %p69
      %s71 = ssub.s32 %s21, %s28
      %p72 = scmp.eq.s32.totalorder %s71, 0
      %s74 = sadd.s32 %s73, 1
      %s75 = scalar_select %p72, %s73, %s74
      %p78 = pneg %p72
      %p79 = scmp.eq.s32.totalorder %s21, 1
      %p80 = por %p78, %p79
      %p81 = scmp.ne.s32.totalorder %s73, %s76
      %p82 = scmp.eq.s32.totalorder %s21, 0
      %p83 = por %p81, %p82
      %p84 = scmp.ne.s32.totalorder %s73, %s76
      %p85 = scmp.eq.s32.totalorder %s26, 1
      %p86 = por %p84, %p85
      %p87 = scmp.ne.s32.totalorder %s76, %s77
      %p88 = scmp.eq.s32.totalorder %s26, 0
      %p89 = por %p87, %p88
      %p90 = scmp.ne.s32.totalorder %s76, %s77
      %p91 = scmp.eq.s32.totalorder %s27, 1
      %p92 = por %p90, %p91
      %p94 = scmp.ne.s32.totalorder %s77, %s93
      %p95 = scmp.eq.s32.totalorder %s27, 0
      %p96 = por %p94, %p95
      %s98 = sadd.s32 %s97, 1
      %p101 = scmp.eq.s32.totalorder %s21, 1
      %p102 = scmp.ne.s32.totalorder %s97, %s99
      %p103 = scmp.eq.s32.totalorder %s21, 0
      %p104 = por %p102, %p103
      %p105 = scmp.ne.s32.totalorder %s97, %s99
      %p106 = scmp.eq.s32.totalorder %s26, 1
      %p107 = por %p105, %p106
      %p108 = scmp.ne.s32.totalorder %s99, %s100
      %p109 = scmp.eq.s32.totalorder %s26, 0
      %p110 = por %p108, %p109
      %p111 = scmp.ne.s32.totalorder %s99, %s100
      %p112 = scmp.eq.s32.totalorder %s27, 1
      %p113 = por %p111, %p112
      %p115 = scmp.ne.s32.totalorder %s100, %s114
      %p116 = scmp.eq.s32.totalorder %s27, 0
      %p117 = por %p115, %p116
      %p118 = scmp.le.s32.totalorder 1, %s21
      %p119 = scmp.lt.s32.totalorder %s21, 3
      %p120 = pnand %p118, %p119
      %p121 = pneg %p120
      // Predicated region
      $region9: #{tpu_custom_call.1} parent=5 // pred_check
        _
      $region10: #{tpu_custom_call.1} parent=5 // pred_check_branch
        %123 = sbr.rel (%p120) target = $region12
      $region11: #{tpu_custom_call.1} parent=5 // pred_region
        %s124 = ssub.s32 %s21, 1
        // Predicated region
        $region13: #{tpu_custom_call.1} parent=11 // pred_check
          %p125 = pneg %p42
        $region14: #{tpu_custom_call.1} parent=11 // pred_check_branch
          %127 = sbr.rel (%p125) target = $region16
        $region15: #{tpu_custom_call.1} parent=11 // pred_region
          %s129 = ssub.s32 512, 512
          %130 = vsyncadd [#allocation7], %s129
          %s131 = sshll.u32 [#allocation6], 4
          %s132 = int_to_ptr.vmem [resolvable:$true] %s131
          %137 = dma.hbm_to_vmem [thread:$0]  %s2, 512, %s132, [#allocation7], 128, 128, 8
        $region16: #{tpu_custom_call.1} parent=11 // pred_fallthru
          _
        // Predicated region
        $region17: #{tpu_custom_call.1} parent=11 // pred_check
          %p138 = pneg %p63
        $region18: #{tpu_custom_call.1} parent=11 // pred_check_branch
          %140 = sbr.rel (%p138) target = $region20
        $region19: #{tpu_custom_call.1} parent=11 // pred_region
          _
        $region20: #{tpu_custom_call.1} parent=11 // pred_fallthru
          _
      $region12: #{tpu_custom_call.1} parent=5 // pred_fallthru
        _
      %p141 = scmp.lt.s32.totalorder %s21, 2
      // Predicated region
      $region21: #{tpu_custom_call.1} parent=5 // pred_check
        %p142 = pneg %p141
      $region22: #{tpu_custom_call.1} parent=5 // pred_check_branch
        %144 = sbr.rel (%p142) target = $region24
      $region23: #{tpu_custom_call.1} parent=5 // pred_region
        _
      $region24: #{tpu_custom_call.1} parent=5 // pred_fallthru
        _
      %p145 = scmp.le.s32.totalorder 1, %s21
      %p146 = scmp.lt.s32.totalorder %s21, 3
      %p147 = pnand %p145, %p146
      %p148 = pneg %p147
      // Predicated region
      $region25: #{tpu_custom_call.1} parent=5 // pred_check
        _
      $region26: #{tpu_custom_call.1} parent=5 // pred_check_branch
        %150 = sbr.rel (%p147) target = $region28
      $region27: #{tpu_custom_call.1} parent=5 // pred_region
        %s151 = ssub.s32 %s21, 1
        // Predicated region
        $region29: #{tpu_custom_call.1} parent=27 // pred_check
          %p152 = pneg %p42
        $region30: #{tpu_custom_call.1} parent=27 // pred_check_branch
          %154 = sbr.rel (%p152) target = $region32
        $region31: #{tpu_custom_call.1} parent=27 // pred_region
          %155 = dma.done [#allocation7], 512
        $region32: #{tpu_custom_call.1} parent=27 // pred_fallthru
          _
        %p156 = pneg %p42
        %p157 = pneg %p39
        %p158 = pneg %p63
        %p159 = pneg %p60
        %p160 = pneg %p89
        %p161 = pneg %p86
        %s162 = sand.u32 %s76, 1
        %s163 = scalar_lea.sflag [#allocation8], %s162
        %s164 = sand.u32 %s76, 1
        %s165 = smul.addr %s164, 8
        %s166 = scalar_lea.vmem [#allocation9], %s165
        %p167 = pneg %p110
        %p168 = pneg %p107
        %s169 = sand.u32 %s26, 1
        %p170 = scmp.eq.s32.totalorder %s26, 0
        // Predicated region
        $region33: #{tpu_custom_call.1} parent=27 // pred_check
          %p171 = pneg %p170
        $region34: #{tpu_custom_call.1} parent=27 // pred_check_branch
          %173 = sbr.rel (%p171) target = $region36
        $region35: #{tpu_custom_call.1} parent=27 // pred_region
          loop: start=0, step=1, limit=8
          $region37: #{tpu_custom_call.1} parent=35 // loop_pre_header
            _
          $region38: #{tpu_custom_call.1} parent=35 // loop_header
            %s175 = sphi 0, %s179
            %p176 = scmp.ge.s32.totalorder %s175, 8
          $region39: #{tpu_custom_call.1} parent=35 // loop_header_branch
            %178 = sbr.rel (%p176) target = $region43
          $region40: #{tpu_custom_call.1} parent=35 // loop_body
            %s180 = sld [smem:[#allocation5 + %s175]]
            %s181 = smul.addr %s180, 16
            %s182 = scalar_lea.hbm %s1, %s181
            %s183 = scalar_lea.vmem [#allocation2], %s175
            %s184 = scalar_lea.sflag [#allocation3], %s175
            // Predicated region
            $region44: #{tpu_custom_call.1} parent=40 // pred_check
              _
            $region45: #{tpu_custom_call.1} parent=40 // pred_check_branch
              %186 = sbr.rel target = $region47
            $region46: #{tpu_custom_call.1} parent=40 // pred_region
              %187 = sst [smem:[#allocation14]] [#allocation13]
              %188 = sst [smem:[#allocation15]] [#allocation12]
            $region47: #{tpu_custom_call.1} parent=40 // pred_fallthru
              _
            %190 = shalt.err (0)
            %s192 = sshll.u32 %s183, 4
            %s193 = int_to_ptr.vmem [resolvable:$true] %s192
            %195 = dma.hbm_to_vmem [thread:$0]  %s182, 16, %s193, %s184
          $region41: #{tpu_custom_call.1} parent=35 // loop_footer
            %s179 = sadd.s32 1, %s175
          $region42: #{tpu_custom_call.1} parent=35 // loop_footer_branch
            %174 = sbr.rel target = $region38
          $region43: #{tpu_custom_call.1} parent=35 // loop_exit
            _
        $region36: #{tpu_custom_call.1} parent=27 // pred_fallthru
          _
        %s196 = sadd.s32 %s26, 1
        %p197 = scmp.lt.s32.totalorder %s196, 2
        // Predicated region
        $region48: #{tpu_custom_call.1} parent=27 // pred_check
          %p198 = pneg %p197
        $region49: #{tpu_custom_call.1} parent=27 // pred_check_branch
          %200 = sbr.rel (%p198) target = $region51
        $region50: #{tpu_custom_call.1} parent=27 // pred_region
          %s201 = ssub.s32 1, %s169
          loop: start=0, step=1, limit=8
          $region52: #{tpu_custom_call.1} parent=50 // loop_pre_header
            _
          $region53: #{tpu_custom_call.1} parent=50 // loop_header
            %s203 = sphi 0, %s207
            %p204 = scmp.ge.s32.totalorder %s203, 8
          $region54: #{tpu_custom_call.1} parent=50 // loop_header_branch
            %206 = sbr.rel (%p204) target = $region58
          $region55: #{tpu_custom_call.1} parent=50 // loop_body
            %s208 = smul.u32 %s196, 8
            %s209 = sadd.s32 %s208, %s203
            %s210 = sld [smem:[#allocation5 + %s209]]
            %s211 = smul.addr %s210, 16
            %s212 = scalar_lea.hbm %s1, %s211
            %s213 = smul.u32 %s201, 8
            %s214 = sadd.s32 %s203, %s213
            %s215 = scalar_lea.vmem [#allocation2], %s214
            %s216 = scalar_lea.sflag [#allocation3], %s214
            // Predicated region
            $region59: #{tpu_custom_call.1} parent=55 // pred_check
              _
            $region60: #{tpu_custom_call.1} parent=55 // pred_check_branch
              %218 = sbr.rel target = $region62
            $region61: #{tpu_custom_call.1} parent=55 // pred_region
              %219 = sst [smem:[#allocation14]] [#allocation17]
              %220 = sst [smem:[#allocation15]] [#allocation16]
            $region62: #{tpu_custom_call.1} parent=55 // pred_fallthru
              _
            %222 = shalt.err (0)
            %s224 = sshll.u32 %s215, 4
            %s225 = int_to_ptr.vmem [resolvable:$true] %s224
            %227 = dma.hbm_to_vmem [thread:$0]  %s212, 16, %s225, %s216
          $region56: #{tpu_custom_call.1} parent=50 // loop_footer
            %s207 = sadd.s32 1, %s203
          $region57: #{tpu_custom_call.1} parent=50 // loop_footer_branch
            %202 = sbr.rel target = $region53
          $region58: #{tpu_custom_call.1} parent=50 // loop_exit
            _
        $region51: #{tpu_custom_call.1} parent=27 // pred_fallthru
          _
        // Predicated region
        $region63: #{tpu_custom_call.1} parent=27 // pred_check
          %p228 = pneg %p170
        $region64: #{tpu_custom_call.1} parent=27 // pred_check_branch
          %230 = sbr.rel (%p228) target = $region66
        $region65: #{tpu_custom_call.1} parent=27 // pred_region
          %v231 = vld [vmem:[#allocation6] sm:$0xff]
          %v232 = vld [vmem:[#allocation6 + $0x8] sm:$0xff]
          %v233 = vld [vmem:[#allocation6 + $0x10] sm:$0xff]
          %v234 = vld [vmem:[#allocation6 + $0x18] sm:$0xff]
          %235 = vadd.xlane.f32.xlu0 %v231
          %v236 = vpop.xlane.xlu0 %235
          %237 = vadd.xlane.f32.xlu0 %v232
          %v238 = vpop.xlane.xlu0 %237
          %239 = vadd.xlane.f32.xlu0 %v233
          %v240 = vpop.xlane.xlu0 %239
          %241 = vadd.xlane.f32.xlu0 %v234
          %v242 = vpop.xlane.xlu0 %241
          %v243 = vrcp.pop 128.0
          %v244 = vmul.f32 %v236, %v243
          %v245 = vmul.f32 %v238, %v243
          %v246 = vmul.f32 %v240, %v243
          %v247 = vmul.f32 %v242, %v243
          %v248 = vsub.f32 %v231, %v244
          %v249 = vsub.f32 %v232, %v245
          %v250 = vsub.f32 %v233, %v246
          %v251 = vsub.f32 %v234, %v247
          %v252 = vmul.f32 %v248, %v248
          %v253 = vmul.f32 %v249, %v249
          %v254 = vmul.f32 %v250, %v250
          %v255 = vmul.f32 %v251, %v251
          %256 = vadd.xlane.f32.xlu0 %v252
          %v257 = vpop.xlane.xlu0 %256
          %258 = vadd.xlane.f32.xlu0 %v253
          %v259 = vpop.xlane.xlu0 %258
          %260 = vadd.xlane.f32.xlu0 %v254
          %v261 = vpop.xlane.xlu0 %260
          %262 = vadd.xlane.f32.xlu0 %v255
          %v263 = vpop.xlane.xlu0 %262
          %v264 = vmul.f32 %v257, %v243
          %v265 = vmul.f32 %v259, %v243
          %v266 = vmul.f32 %v261, %v243
          %v267 = vmul.f32 %v263, %v243
          %v268 = vadd.f32 %v264, 1e-07
          %v269 = vadd.f32 %v265, 1e-07
          %v270 = vadd.f32 %v266, 1e-07
          %v271 = vadd.f32 %v267, 1e-07
          %v272 = vrsqrt.pop %v268
          %v273 = vrsqrt.pop %v269
          %v274 = vrsqrt.pop %v270
          %v275 = vrsqrt.pop %v271
          %v276 = vmul.f32 %v248, %v272
          %v277 = vmul.f32 %v249, %v273
          %v278 = vmul.f32 %v250, %v274
          %v279 = vmul.f32 %v251, %v275
          %v280 = vld [vmem:[%s3] sm:$0x1]
          %v281 = vld [vmem:[%s3 + $0x1] sm:$0x1]
          %v282 = vlaneseq
          %v283 = vshrl.u32 %v282, 7
          %v284 = vsub.s32 0, %v283
          %v285 = vrot.slane %v280, %v284
          %v286 = vmul.f32 %v276, %v285
          %v287 = vmul.f32 %v277, %v285
          %v288 = vmul.f32 %v278, %v285
          %v289 = vmul.f32 %v279, %v285
          %v290 = vlaneseq
          %v291 = vshrl.u32 %v290, 7
          %v292 = vsub.s32 0, %v291
          %v293 = vrot.slane %v281, %v292
          %v294 = vadd.f32 %v286, %v293
          %v295 = vadd.f32 %v287, %v293
          %v296 = vadd.f32 %v288, %v293
          %v297 = vadd.f32 %v289, %v293
          %298 = vst [vmem:[#allocation10] sm:$0xff] %v294
          %299 = vst [vmem:[#allocation10 + $0x8] sm:$0xff] %v295
          %300 = vst [vmem:[#allocation10 + $0x10] sm:$0xff] %v296
          %301 = vst [vmem:[#allocation10 + $0x18] sm:$0xff] %v297
        $region66: #{tpu_custom_call.1} parent=27 // pred_fallthru
          _
        loop: start=0, step=1, limit=8
        $region67: #{tpu_custom_call.1} parent=27 // loop_pre_header
          _
        $region68: #{tpu_custom_call.1} parent=27 // loop_header
          %s303 = sphi 0, %s307
          %p304 = scmp.ge.s32.totalorder %s303, 8
        $region69: #{tpu_custom_call.1} parent=27 // loop_header_branch
          %306 = sbr.rel (%p304) target = $region73
        $region70: #{tpu_custom_call.1} parent=27 // loop_body
          %s308 = smul.u32 %s169, 8
          %s309 = sadd.s32 %s303, %s308
          %s310 = scalar_lea.sflag [#allocation3], %s309
          %s311 = smul.u32 1, 1
          %s312 = sshll.u32 %s311, 4
          %313 = dma.done %s310, %s312
        $region71: #{tpu_custom_call.1} parent=27 // loop_footer
          %s307 = sadd.s32 1, %s303
        $region72: #{tpu_custom_call.1} parent=27 // loop_footer_branch
          %302 = sbr.rel target = $region68
        $region73: #{tpu_custom_call.1} parent=27 // loop_exit
          _
        %s314 = smul.u32 %s169, 8
        %s315 = scalar_lea.vmem [#allocation2], %s314
        %v316 = vld [vmem:[%s315] sm:$0xff]
        %317 = vadd.xlane.f32.xlu0 %v316
        %v318 = vpop.xlane.xlu0 %317
        %v319 = vrcp.pop 128.0
        %v320 = vmul.f32 %v318, %v319
        %v321 = vsub.f32 %v316, %v320
        %v322 = vmul.f32 %v321, %v321
        %323 = vadd.xlane.f32.xlu0 %v322
        %v324 = vpop.xlane.xlu0 %323
        %v325 = vmul.f32 %v324, %v319
        %v326 = vadd.f32 %v325, 1e-07
        %v327 = vrsqrt.pop %v326
        %v328 = vmul.f32 %v321, %v327
        %329 = vst [vmem:[%s166] sm:$0xff] %v328
        %s330 = sand.u32 %s76, 1
        %s331 = scalar_lea.sflag [#allocation8], %s330
        %s332 = sand.u32 %s76, 1
        %s333 = smul.addr %s332, 8
        %s334 = scalar_lea.vmem [#allocation9], %s333
        // Predicated region
        $region74: #{tpu_custom_call.1} parent=27 // pred_check
          %p335 = pneg %p86
        $region75: #{tpu_custom_call.1} parent=27 // pred_check_branch
          %337 = sbr.rel (%p335) target = $region77
        $region76: #{tpu_custom_call.1} parent=27 // pred_region
          %s339 = ssub.s32 128, 128
          %340 = vsyncadd %s331, %s339
          %s341 = smul.addr %s26, 128
          %s342 = scalar_lea.hbm %s4, %s341
          %s344 = sshll.u32 %s334, 4
          %s345 = int_to_ptr.vmem [resolvable:$true] %s344
          %347 = dma.vmem_to_hbm [thread:$0]  %s345, 128, %s342, %s331
        $region77: #{tpu_custom_call.1} parent=27 // pred_fallthru
          _
        // Predicated region
        $region78: #{tpu_custom_call.1} parent=27 // pred_check
          %p348 = pneg %p107
        $region79: #{tpu_custom_call.1} parent=27 // pred_check_branch
          %350 = sbr.rel (%p348) target = $region81
        $region80: #{tpu_custom_call.1} parent=27 // pred_region
          %s352 = ssub.s32 512, 512
          %353 = vsyncadd [#allocation11], %s352
          %s354 = sshll.u32 [#allocation10], 4
          %s355 = int_to_ptr.vmem [resolvable:$true] %s354
          %360 = dma.vmem_to_hbm [thread:$0]  %s355, 512, %s5, [#allocation11], 128, 128, 8
        $region81: #{tpu_custom_call.1} parent=27 // pred_fallthru
          _
        // Predicated region
        $region82: #{tpu_custom_call.1} parent=27 // pred_check
          %p361 = pneg %p107
        $region83: #{tpu_custom_call.1} parent=27 // pred_check_branch
          %363 = sbr.rel (%p361) target = $region85
        $region84: #{tpu_custom_call.1} parent=27 // pred_region
          %364 = dma.done [#allocation11], 512
        $region85: #{tpu_custom_call.1} parent=27 // pred_fallthru
          _
      $region28: #{tpu_custom_call.1} parent=5 // pred_fallthru
        _
      %p365 = scmp.le.s32.totalorder 2, %s21
      // Predicated region
      $region86: #{tpu_custom_call.1} parent=5 // pred_check
        %p366 = pneg %p365
      $region87: #{tpu_custom_call.1} parent=5 // pred_check_branch
        %368 = sbr.rel (%p366) target = $region89
      $region88: #{tpu_custom_call.1} parent=5 // pred_region
        %s369 = ssub.s32 %s21, 2
        // Predicated region
        $region90: #{tpu_custom_call.1} parent=88 // pred_check
          %p370 = pneg %p92
        $region91: #{tpu_custom_call.1} parent=88 // pred_check_branch
          %372 = sbr.rel (%p370) target = $region93
        $region92: #{tpu_custom_call.1} parent=88 // pred_region
          %s373 = sand.u32 %s77, 1
          %s374 = scalar_lea.sflag [#allocation8], %s373
          %s375 = sand.u32 %s77, 1
          %s376 = smul.addr %s375, 8
          %s377 = scalar_lea.vmem [#allocation9], %s376
          %378 = dma.done %s374, 128
        $region93: #{tpu_custom_call.1} parent=88 // pred_fallthru
          _
      $region89: #{tpu_custom_call.1} parent=5 // pred_fallthru
        _
    $region6: #{tpu_custom_call.1} parent=1 // loop_footer
      %s25 = sadd.s32 1, %s21
    $region7: #{tpu_custom_call.1} parent=1 // loop_footer_branch
      %20 = sbr.rel target = $region3
    $region8: #{tpu_custom_call.1} parent=1 // loop_exit
      _
    %379 = vsyncpa [#allocation7], 1
    %s380 = scalar_lea.sflag [#allocation7], 1
    %381 = vsyncpa %s380, 1
    %382 = vsyncpa [#allocation8], 1
    %s383 = scalar_lea.sflag [#allocation8], 1
    %384 = vsyncpa %s383, 1
    %385 = vsyncpa [#allocation11], 1
  %386 = vsyncmov [#allocation3]
  %s387 = vpop.sfrf %386
  %p388 = scmp.eq.s32.totalorder %s387, 0
  %p389 = pneg %p388
  %391 = shalt.err (%p389)
  %s392 = scalar_lea.sflag [#allocation3], 1
  %393 = vsyncmov %s392
  %s394 = vpop.sfrf %393
  %p395 = scmp.eq.s32.totalorder %s394, 0
  %p396 = pneg %p395
  %398 = shalt.err (%p396)
  %s399 = scalar_lea.sflag [#allocation3], 2
  %400 = vsyncmov %s399
  %s401 = vpop.sfrf %400
  %p402 = scmp.eq.s32.totalorder %s401, 0
  %p403 = pneg %p402
  %405 = shalt.err (%p403)
  %s406 = scalar_lea.sflag [#allocation3], 3
  %407 = vsyncmov %s406
  %s408 = vpop.sfrf %407
  %p409 = scmp.eq.s32.totalorder %s408, 0
  %p410 = pneg %p409
  %412 = shalt.err (%p410)
  %s413 = scalar_lea.sflag [#allocation3], 4
  %414 = vsyncmov %s413
  %s415 = vpop.sfrf %414
  %p416 = scmp.eq.s32.totalorder %s415, 0
  %p417 = pneg %p416
  %419 = shalt.err (%p417)
  %s420 = scalar_lea.sflag [#allocation3], 5
  %421 = vsyncmov %s420
  %s422 = vpop.sfrf %421
  %p423 = scmp.eq.s32.totalorder %s422, 0
  %p424 = pneg %p423
  %426 = shalt.err (%p424)
  %s427 = scalar_lea.sflag [#allocation3], 6
  %428 = vsyncmov %s427
  %s429 = vpop.sfrf %428
  %p430 = scmp.eq.s32.totalorder %s429, 0
  %p431 = pneg %p430
  %433 = shalt.err (%p431)
  %s434 = scalar_lea.sflag [#allocation3], 7
  %435 = vsyncmov %s434
  %s436 = vpop.sfrf %435
  %p437 = scmp.eq.s32.totalorder %s436, 0
  %p438 = pneg %p437
  %440 = shalt.err (%p438)
  %s441 = scalar_lea.sflag [#allocation3], 8
  %442 = vsyncmov %s441
  %s443 = vpop.sfrf %442
  %p444 = scmp.eq.s32.totalorder %s443, 0
  %p445 = pneg %p444
  %447 = shalt.err (%p445)
  %s448 = scalar_lea.sflag [#allocation3], 9
  %449 = vsyncmov %s448
  %s450 = vpop.sfrf %449
  %p451 = scmp.eq.s32.totalorder %s450, 0
  %p452 = pneg %p451
  %454 = shalt.err (%p452)
  %s455 = scalar_lea.sflag [#allocation3], 10
  %456 = vsyncmov %s455
  %s457 = vpop.sfrf %456
  %p458 = scmp.eq.s32.totalorder %s457, 0
  %p459 = pneg %p458
  %461 = shalt.err (%p459)
  %s462 = scalar_lea.sflag [#allocation3], 11
  %463 = vsyncmov %s462
  %s464 = vpop.sfrf %463
  %p465 = scmp.eq.s32.totalorder %s464, 0
  %p466 = pneg %p465
  %468 = shalt.err (%p466)
  %s469 = scalar_lea.sflag [#allocation3], 12
  %470 = vsyncmov %s469
  %s471 = vpop.sfrf %470
  %p472 = scmp.eq.s32.totalorder %s471, 0
  %p473 = pneg %p472
  %475 = shalt.err (%p473)
  %s476 = scalar_lea.sflag [#allocation3], 13
  %477 = vsyncmov %s476
  %s478 = vpop.sfrf %477
  %p479 = scmp.eq.s32.totalorder %s478, 0
  %p480 = pneg %p479
  %482 = shalt.err (%p480)
  %s483 = scalar_lea.sflag [#allocation3], 14
  %484 = vsyncmov %s483
  %s485 = vpop.sfrf %484
  %p486 = scmp.eq.s32.totalorder %s485, 0
  %p487 = pneg %p486
  %489 = shalt.err (%p487)
  %s490 = scalar_lea.sflag [#allocation3], 15
  %491 = vsyncmov %s490
  %s492 = vpop.sfrf %491
  %p493 = scmp.eq.s32.totalorder %s492, 0
  %p494 = pneg %p493
  %496 = shalt.err (%p494)

</llo_original>
